<compile_context>
chip_gen: v7x
topology: tpu7x:2x2x1
jax: 0.10.0
libtpu: 0.0.40
codegen_flags: <defaults>
</compile_context>

<pallas_src>
import functools

import jax
import jax.numpy as jnp
from jax.experimental import pallas as pl
from jax.experimental.pallas import tpu as pltpu

_LANES = 128
# ~2 MiB per block; x4 (double-buffered in + out) stays under every
# generation's default scoped-VMEM limit, so no vmem_limit_bytes needed.
_TARGET_BLOCK_BYTES = 2 * 1024 * 1024


def _sublane_multiple(dtype) -> int:
    """Native sublane packing for the dtype (f32->8, bf16->16, int8/fp8->32)."""
    itemsize = jnp.dtype(dtype).itemsize
    if itemsize >= 4:
        return 8
    return 32 // itemsize


def _swish_kernel(x_ref, o_ref, *, use_hard: bool):
    x = x_ref[...].astype(jnp.float32)
    if use_hard:
        # x * relu6(x + 3) / 6
        y = x * jnp.clip(x + 3.0, 0.0, 6.0) * (1.0 / 6.0)
    else:
        # x * sigmoid(x); VPU/EUP cost is irrelevant here (kernel is HBM-bound).
        y = x * jax.nn.sigmoid(x)
    o_ref[...] = y.astype(o_ref.dtype)


def swish(x: jax.Array, use_hard: bool = False) -> jax.Array:
    """Elementwise Swish / hard-Swish via a Pallas TPU kernel (any shape/dtype)."""
    orig_shape = x.shape
    orig_dtype = x.dtype
    n = x.size
    if n == 0:
        return x

    flat = x.reshape(-1)  # metadata-only for contiguous inputs

    itemsize = jnp.dtype(orig_dtype).itemsize
    sub = _sublane_multiple(orig_dtype)

    # Only pad when the flat length is not a multiple of the lane width; the
    # block-granularity ragged tail is handled by Pallas' masked edge block.
    n_main = pl.cdiv(n, _LANES) * _LANES
    padded = n_main != n
    if padded:
        # TODO(synk): the rare n % 128 != 0 case still pays one pad copy; a
        # masked 1-D tail block could remove it if it ever matters.
        flat = jnp.pad(flat, (0, n_main - n))

    rows = n_main // _LANES
    slab = flat.reshape(rows, _LANES)  # metadata-only

    # Row-block sized for ~2 MiB, rounded to the dtype-native sublane multiple,
    # never larger than the (rounded-up) row count.
    target_rows = max(sub, (_TARGET_BLOCK_BYTES // (_LANES * itemsize)) // sub * sub)
    block_rows = min(target_rows, pl.cdiv(rows, sub) * sub)

    grid = (pl.cdiv(rows, block_rows),)  # partial last block is masked by Pallas

    kernel = functools.partial(_swish_kernel, use_hard=use_hard)

    out_slab = pl.pallas_call(
        kernel,
        out_shape=jax.ShapeDtypeStruct((rows, _LANES), orig_dtype),
        grid_spec=pltpu.PrefetchScalarGridSpec(
            num_scalar_prefetch=0,
            grid=grid,
            in_specs=[pl.BlockSpec((block_rows, _LANES), lambda i: (i, 0))],
            out_specs=pl.BlockSpec((block_rows, _LANES), lambda i: (i, 0)),
        ),
        compiler_params=pltpu.CompilerParams(
            dimension_semantics=("parallel",),
        ),
    )(slab)

    out_flat = out_slab.reshape(-1)
    if padded:
        out_flat = out_flat[:n]
    return out_flat.reshape(orig_shape)


def _swish_ref(x, use_hard=False):
    xf = x.astype(jnp.float32)
    if use_hard:
        y = xf * jnp.clip(xf + 3.0, 0.0, 6.0) / 6.0
    else:
        y = xf * jax.nn.sigmoid(xf)
    return y.astype(x.dtype)


def _check(x, use_hard, atol, rtol):
    y = swish(x, use_hard=use_hard)
    jax.block_until_ready(y)
    y_ref = _swish_ref(x, use_hard=use_hard)
    assert y.shape == x.shape and y.dtype == x.dtype
    assert jnp.allclose(
        y.astype(jnp.float32), y_ref.astype(jnp.float32), atol=atol, rtol=rtol
    ), f"mismatch: shape={x.shape} dtype={x.dtype} use_hard={use_hard}"


if __name__ == "__main__":
    key = jax.random.PRNGKey(0)
    k1, k2, k3, k4 = jax.random.split(key, 4)

    # 1) Small NCHW f32 (the module's typical conv-activation input).
    x1 = jax.random.normal(k1, (2, 4, 16, 16), dtype=jnp.float32)
    _check(x1, use_hard=False, atol=1e-5, rtol=1e-5)
    _check(x1, use_hard=True, atol=1e-5, rtol=1e-5)

    # 2) bf16 input (exercises dtype-aware 16-sublane tiling).
    x2 = jax.random.normal(k2, (2, 4, 16, 16)).astype(jnp.bfloat16)
    _check(x2, use_hard=False, atol=1e-2, rtol=1e-2)
    _check(x2, use_hard=True, atol=1e-2, rtol=1e-2)

    # 3) Size not a multiple of 128 (ragged pad path).
    x3 = jax.random.normal(k3, (2, 3, 17, 19), dtype=jnp.float32)
    _check(x3, use_hard=False, atol=1e-5, rtol=1e-5)

    # 4) Multi-block grid with a partial (masked) final block:
    #    720000 elems = 5625 rows of 128; block_rows = 4096 -> grid = (2,),
    #    second block is partial. Catches the old truncation bug.
    x4 = jax.random.normal(k4, (4500, 160), dtype=jnp.float32)
    _check(x4, use_hard=False, atol=1e-5, rtol=1e-5)
    _check(x4, use_hard=True, atol=1e-5, rtol=1e-5)

    print("KERNEL_OK")
</pallas_src>

<mosaic_0001>
module attributes {stable_mosaic.version = 11 : i64} {
  func.func @_swish_kernel(%arg0: i32, %arg1: memref<16x128xf32, #tpu.memory_space<vmem>>, %arg2: memref<16x128xf32, #tpu.memory_space<vmem>>) attributes {dimension_semantics = [#tpu.dimension_semantics<parallel>], iteration_bounds = array<i64: 1>, scalar_prefetch = 0 : i64, scratch_operands = 0 : i64, tpu.core_type = #tpu.core_type<tc>, window_params = [{transform_indices = @transform_0, window_bounds = array<i64: 16, 128>}, {transform_indices = @transform_1, window_bounds = array<i64: 16, 128>}]} {
    %c0 = arith.constant 0 : index
    %c0_0 = arith.constant 0 : index
    %0 = vector.load %arg1[%c0, %c0_0] : memref<16x128xf32, #tpu.memory_space<vmem>>, vector<16x128xf32>
    %1 = arith.negf %0 : vector<16x128xf32>
    %2 = math.exp %1 : vector<16x128xf32>
    %cst = arith.constant 1.000000e+00 : f32
    %3 = vector.broadcast %cst : f32 to vector<16x128xf32>
    %4 = arith.addf %3, %2 : vector<16x128xf32>
    %5 = arith.divf %3, %4 : vector<16x128xf32>
    %6 = arith.mulf %0, %5 : vector<16x128xf32>
    %c0_1 = arith.constant 0 : index
    %c0_2 = arith.constant 0 : index
    %7 = vector.load %arg2[%c0_1, %c0_2] : memref<16x128xf32, #tpu.memory_space<vmem>>, vector<16x128xf32>
    tpu.vector_store %arg2[%c0_1, %c0_2], %6 {strides = array<i32>} : memref<16x128xf32, #tpu.memory_space<vmem>>, vector<16x128xf32>,
    return
  }
  func.func @transform_0(%arg0: i32) -> (i32, i32) {
    %c0_i32 = arith.constant 0 : i32
    %c0_i32_0 = arith.constant 0 : i32
    return %arg0, %c0_i32 : i32, i32
  }
  func.func @transform_1(%arg0: i32) -> (i32, i32) {
    %c0_i32 = arith.constant 0 : i32
    %c0_i32_0 = arith.constant 0 : i32
    return %arg0, %c0_i32 : i32, i32
  }
}

</mosaic_0001>

<llo_original>
// kernel: tpu_custom_call.1
$region0: #{tpu_custom_call.1}
  #allocation0 [shape = 'u32[]', space=smem, size = 0x4, offset = 0x4, fixed_abs, tag = 'smem constant byte address 0x4 - core index']
  #allocation1 [shape = 'u32[144,128]{1,0:T(1,128)}', space=vmem, size = 0x12000, scoped, tag = 'internal scratch']
  %s0 = inlined_call_operand.hbm [shape: f32[16,128], index: 0, kind: input, shape index: {}]
  %s1 = inlined_call_operand.hbm [shape: f32[16,128], index: 1, kind: output, shape index: {}]
  %s2 = sld [smem:[#allocation0]]
  $region18: #{tpu_custom_call.1} parent=0
    _
  %s4 = ssub.s32 1, %s2
  %s5 = scalar_select 0, %s4, %s2
  $region1: #{tpu_custom_call.1} parent=0
    #allocation2 [shape = 'u8[8192]{0}', space=vmem, size = 0x2000, scoped, tag = 'input window, operand 0, single buffered']
    #allocation3 [shape = 's32[1]{0}', space=sflag, size = 0x4, scoped, tag = 'scoped memory for tpu_custom_call.1']
    #allocation4 [shape = 's32[1]{0}', space=sflag, size = 0x4, scoped, tag = 'scoped memory for tpu_custom_call.1']
    #allocation5 [shape = 'u8[8192]{0}', space=vmem, size = 0x2000, scoped, tag = 'output window, operand 0, single buffered']
    %6 = vsyncpa [#allocation3], 0
    %7 = vsyncpa [#allocation4], 0
    // Predicated region
    $region2: #{tpu_custom_call.1} parent=1 // pred_check
      _
    $region3: #{tpu_custom_call.1} parent=1 // pred_check_branch
      %9 = sbr.rel (0) target = $region5
    $region4: #{tpu_custom_call.1} parent=1 // pred_region
      %s11 = ssub.s32 256, 256
      %12 = vsyncadd [#allocation3], %s11
      %s13 = sshll.u32 [#allocation2], 4
      %s14 = int_to_ptr.vmem [resolvable:$true] %s13
      %19 = dma.hbm_to_vmem [thread:$0]  %s0, 256, %s14, [#allocation3], 128, 128, 8
    $region5: #{tpu_custom_call.1} parent=1 // pred_fallthru
      _
    // Predicated region
    $region6: #{tpu_custom_call.1} parent=1 // pred_check
      _
    $region7: #{tpu_custom_call.1} parent=1 // pred_check_branch
      %21 = sbr.rel (0) target = $region9
    $region8: #{tpu_custom_call.1} parent=1 // pred_region
      %22 = dma.done [#allocation3], 256
    $region9: #{tpu_custom_call.1} parent=1 // pred_fallthru
      _
    %v23 = vld [vmem:[#allocation2] sm:$0xff]
    %v24 = vld [vmem:[#allocation2 + $0x8] sm:$0xff]
    %v25 = vxor.u32 %v23, 2147483648
    %v26 = vxor.u32 %v24, 2147483648
    %v27 = vmul.f32 %v25, 1.442695
    %v28 = vpow.pop %v27
    %v29 = vmul.f32 %v26, 1.442695
    %v30 = vpow.pop %v29
    %v31 = vadd.f32 %v28, 1.0
    %v32 = vadd.f32 %v30, 1.0
    %v33 = vrcp.pop %v31
    %v34 = vmul.f32 1.0, %v33
    %v35 = vrcp.pop %v32
    %v36 = vmul.f32 1.0, %v35
    %v37 = vmul.f32 %v23, %v34
    %v38 = vmul.f32 %v24, %v36
    %39 = vst [vmem:[#allocation5] sm:$0xff] %v37
    %40 = vst [vmem:[#allocation5 + $0x8] sm:$0xff] %v38
    // Predicated region
    $region10: #{tpu_custom_call.1} parent=1 // pred_check
      _
    $region11: #{tpu_custom_call.1} parent=1 // pred_check_branch
      %42 = sbr.rel (0) target = $region13
    $region12: #{tpu_custom_call.1} parent=1 // pred_region
      %s44 = ssub.s32 256, 256
      %45 = vsyncadd [#allocation4], %s44
      %s46 = sshll.u32 [#allocation5], 4
      %s47 = int_to_ptr.vmem [resolvable:$true] %s46
      %52 = dma.vmem_to_hbm [thread:$0]  %s47, 256, %s1, [#allocation4], 128, 128, 8
    $region13: #{tpu_custom_call.1} parent=1 // pred_fallthru
      _
    // Predicated region
    $region14: #{tpu_custom_call.1} parent=1 // pred_check
      _
    $region15: #{tpu_custom_call.1} parent=1 // pred_check_branch
      %54 = sbr.rel (0) target = $region17
    $region16: #{tpu_custom_call.1} parent=1 // pred_region
      %55 = dma.done [#allocation4], 256
    $region17: #{tpu_custom_call.1} parent=1 // pred_fallthru
      _
    %56 = vsyncpa [#allocation3], 1
    %57 = vsyncpa [#allocation4], 1

</llo_original>
